<compile_context>
chip_gen: v7x
topology: tpu7x:2x2x1
jax: 0.10.0
libtpu: 0.0.40
codegen_flags: <defaults>
</compile_context>

<pallas_src>
import jax
import jax.numpy as jnp
from jax import lax
from jax.experimental import pallas as pl
from jax.experimental.pallas import tpu as pltpu


def _inception_kernel(x_ref, w123_ref, b123_ref, w4_ref, b4_ref, o_ref):
    """Processes a block of b_blk batch elements in native NCL layout.

    x_ref   : (b_blk, C_in, L)      input block (L on lanes, channels on sublanes)
    w123_ref: (5, o123, C_in)       per-tap block weight for the 3 conv branches
    b123_ref: (o123, 1)
    w4_ref  : (o4, C_in)            1x1 conv weight of the pool branch
    b4_ref  : (o4, 1)
    o_ref   : (b_blk, o123 + o4, L)
    """
    b_blk, c_in, L = x_ref.shape
    o123 = w123_ref.shape[1]

    # Small, grid-invariant operands loaded once per step (native dtype MXU feed).
    w123 = w123_ref[...]                                  # (5, o123, C_in)
    b123 = b123_ref[...].astype(jnp.float32)              # (o123, 1)
    w4 = w4_ref[...]                                      # (o4, C_in)
    b4 = b4_ref[...].astype(jnp.float32)                  # (o4, 1)

    # Hoisted lane-position masks for the maxpool's -inf boundary semantics.
    col = lax.broadcasted_iota(jnp.int32, (c_in, L), 1)
    first_col = col == 0
    last_col = col == L - 1
    neg_inf = jnp.asarray(-jnp.inf, x_ref.dtype)

    zpad = jnp.zeros((c_in, 2), x_ref.dtype)

    for bi in range(b_blk):                               # small static unroll
        xb = x_ref[bi]                                    # (C_in, L)
        xp = jnp.concatenate([zpad, xb, zpad], axis=-1)   # (C_in, L + 4) zero halo
        # Tap t reads x[:, l + t - 2] (zeros in the 2-lane halo).
        taps = [xp[:, t:t + L] for t in range(5)]

        # ---- branches 1..3: accumulate 5 small dots into one f32 accumulator ----
        acc = jnp.zeros((o123, L), jnp.float32)
        for t in range(5):
            acc = acc + jnp.dot(w123[t], taps[t],
                                preferred_element_type=jnp.float32)
        y123 = jnp.maximum(acc + b123, 0.0)               # (o123, L)

        # ---- branch 4: MaxPool1d(k=3, s=1, pad=1) + 1x1 conv + ReLU --------------
        # Pool uses -inf border semantics so negative border activations survive.
        left = jnp.where(first_col, neg_inf, taps[1])     # x[:, l-1]
        right = jnp.where(last_col, neg_inf, taps[3])     # x[:, l+1]
        pooled = jnp.maximum(jnp.maximum(left, taps[2]), right)
        y4 = jnp.dot(w4, pooled, preferred_element_type=jnp.float32) + b4
        y4 = jnp.maximum(y4, 0.0)                         # (o4, L)

        # ---- lane-dense stores (full L lanes per row) ----------------------------
        o_ref[bi, :o123, :] = y123.astype(o_ref.dtype)
        o_ref[bi, o123:, :] = y4.astype(o_ref.dtype)


def _pick_batch_block(B):
    """Keep >= 2 parallel grid steps when possible (v7x has 2 TensorCores); group
    batches per step only when B is large enough that per-step overhead matters."""
    if B <= 2:
        return 1
    b_blk = max(1, min(8, B // 2))
    while B % b_blk:                                      # keep it a divisor of B
        b_blk -= 1
    return b_blk


@jax.jit
def naive_inception_forward(x, w1, b1, w2, b2, w3, b3, w4, b4):
    """x: (B, C_in, L) like PyTorch NCL. Returns (B, o1+o2+o3+o4, L)."""
    B, C_in, L = x.shape
    o1, o2, o3, o4 = w1.shape[0], w2.shape[0], w3.shape[0], w4.shape[0]
    o123 = o1 + o2 + o3
    c_total = o123 + o4

    # torch Conv1d weight (C_out, C_in, K) -> per-tap slab (5, C_out, C_in);
    # tap slot for a kernel with padding p is t = (2 - p) + k.
    def tap_weight(w, pad):
        c_out, _, K = w.shape
        m = jnp.zeros((5, c_out, C_in), w.dtype)
        return m.at[2 - pad:2 - pad + K].set(jnp.transpose(w, (2, 0, 1)))

    w123 = jnp.concatenate(
        [tap_weight(w1, 0), tap_weight(w2, 1), tap_weight(w3, 2)], axis=1)  # (5,o123,C_in)
    b123 = jnp.concatenate([b1, b2, b3])[:, None]          # (o123, 1)
    w4m = w4[:, :, 0]                                      # (o4, C_in)
    b4m = b4[:, None]                                      # (o4, 1)

    b_blk = _pick_batch_block(B)

    out = pl.pallas_call(
        _inception_kernel,
        out_shape=jax.ShapeDtypeStruct((B, c_total, L), x.dtype),
        grid=(B // b_blk,),
        in_specs=[
            pl.BlockSpec((b_blk, C_in, L), lambda b: (b, 0, 0)),
            pl.BlockSpec((5, o123, C_in), lambda b: (0, 0, 0)),
            pl.BlockSpec((o123, 1), lambda b: (0, 0)),
            pl.BlockSpec((o4, C_in), lambda b: (0, 0)),
            pl.BlockSpec((o4, 1), lambda b: (0, 0)),
        ],
        out_specs=pl.BlockSpec((b_blk, c_total, L), lambda b: (b, 0, 0)),
        compiler_params=pltpu.CompilerParams(
            dimension_semantics=("parallel",),
            # Leaves headroom below v7x's 64 MiB physical VMEM per TensorCore.
            vmem_limit_bytes=48 * 1024 * 1024),
    )(x, w123, b123, w4m, b4m)

    return out                                             # already (B, c_total, L)


# ------------------------- pure-JAX reference (for checking) -------------------------
def _ref_forward(x, w1, b1, w2, b2, w3, b3, w4, b4):
    def conv1d(xx, w, b, pad):
        y = lax.conv_general_dilated(
            xx, w, window_strides=(1,), padding=[(pad, pad)],
            dimension_numbers=("NCH", "OIH", "NCH"))
        return jnp.maximum(y + b[None, :, None], 0.0)

    y1 = conv1d(x, w1, b1, 0)
    y2 = conv1d(x, w2, b2, 1)
    y3 = conv1d(x, w3, b3, 2)
    pooled = lax.reduce_window(x, -jnp.inf, lax.max,
                               window_dimensions=(1, 1, 3),
                               window_strides=(1, 1, 1),
                               padding=((0, 0), (0, 0), (1, 1)))
    y4 = conv1d(pooled, w4, b4, 0)
    return jnp.concatenate([y1, y2, y3, y4], axis=1)


if __name__ == "__main__":
    # Small shapes consistent with the module: NCL input.
    B, C_in, L = 2, 4, 16
    out_1x1, out_3x3, out_5x5, out_1x1pool = 4, 8, 4, 4

    key = jax.random.PRNGKey(0)
    ks = jax.random.split(key, 9)
    x = jax.random.normal(ks[0], (B, C_in, L), dtype=jnp.float32)

    def init_conv(kw, kb, c_out, c_in, k):
        bound = 1.0 / (c_in * k) ** 0.5   # matches torch Conv1d default init range
        w = jax.random.uniform(kw, (c_out, c_in, k), jnp.float32, -bound, bound)
        b = jax.random.uniform(kb, (c_out,), jnp.float32, -bound, bound)
        return w, b

    w1, b1 = init_conv(ks[1], ks[2], out_1x1, C_in, 1)
    w2, b2 = init_conv(ks[3], ks[4], out_3x3, C_in, 3)
    w3, b3 = init_conv(ks[5], ks[6], out_5x5, C_in, 5)
    w4, b4 = init_conv(ks[7], ks[8], out_1x1pool, C_in, 1)

    out = naive_inception_forward(x, w1, b1, w2, b2, w3, b3, w4, b4)
    out = jax.block_until_ready(out)

    ref = _ref_forward(x, w1, b1, w2, b2, w3, b3, w4, b4)
    assert out.shape == (B, out_1x1 + out_3x3 + out_5x5 + out_1x1pool, L)
    assert jnp.allclose(out, ref, atol=1e-5, rtol=1e-5), "mismatch vs reference"

    print("KERNEL_OK")
</pallas_src>

<mosaic_0001>
module attributes {stable_mosaic.version = 11 : i64} {
  func.func @_inception_kernel(%arg0: i32, %arg1: memref<1x4x16xf32, #tpu.memory_space<vmem>>, %arg2: memref<5x16x4xf32, #tpu.memory_space<vmem>>, %arg3: memref<16x1xf32, #tpu.memory_space<vmem>>, %arg4: memref<4x4xf32, #tpu.memory_space<vmem>>, %arg5: memref<4x1xf32, #tpu.memory_space<vmem>>, %arg6: memref<1x20x16xf32, #tpu.memory_space<vmem>>) attributes {dimension_semantics = [#tpu.dimension_semantics<parallel>], iteration_bounds = array<i64: 2>, scalar_prefetch = 0 : i64, scratch_operands = 0 : i64, tpu.core_type = #tpu.core_type<tc>, window_params = [{transform_indices = @transform_0, window_bounds = array<i64: 1, 4, 16>}, {pipeline_mode = #tpu.pipeline_mode<synchronous>, transform_indices = @transform_1, window_bounds = array<i64: 5, 16, 4>}, {pipeline_mode = #tpu.pipeline_mode<synchronous>, transform_indices = @transform_2, window_bounds = array<i64: 16, 1>}, {pipeline_mode = #tpu.pipeline_mode<synchronous>, transform_indices = @transform_3, window_bounds = array<i64: 4, 4>}, {pipeline_mode = #tpu.pipeline_mode<synchronous>, transform_indices = @transform_4, window_bounds = array<i64: 4, 1>}, {transform_indices = @transform_5, window_bounds = array<i64: 1, 20, 16>}]} {
    %c0 = arith.constant 0 : index
    %c0_0 = arith.constant 0 : index
    %c0_1 = arith.constant 0 : index
    %0 = vector.load %arg2[%c0, %c0_0, %c0_1] : memref<5x16x4xf32, #tpu.memory_space<vmem>>, vector<5x16x4xf32>
    %c0_2 = arith.constant 0 : index
    %c0_3 = arith.constant 0 : index
    %1 = vector.load %arg3[%c0_2, %c0_3] : memref<16x1xf32, #tpu.memory_space<vmem>>, vector<16x1xf32>
    %c0_4 = arith.constant 0 : index
    %c0_5 = arith.constant 0 : index
    %2 = vector.load %arg4[%c0_4, %c0_5] : memref<4x4xf32, #tpu.memory_space<vmem>>, vector<4x4xf32>
    %c0_6 = arith.constant 0 : index
    %c0_7 = arith.constant 0 : index
    %3 = vector.load %arg5[%c0_6, %c0_7] : memref<4x1xf32, #tpu.memory_space<vmem>>, vector<4x1xf32>
    %4 = tpu.iota {dimensions = array<i32: 1>} : vector<4x16xi32>
    %c0_i32 = arith.constant 0 : i32
    %5 = vector.broadcast %c0_i32 : i32 to vector<4x16xi32>
    %6 = arith.cmpi eq, %4, %5 : vector<4x16xi32>
    %c15_i32 = arith.constant 15 : i32
    %7 = vector.broadcast %c15_i32 : i32 to vector<4x16xi32>
    %8 = arith.cmpi eq, %4, %7 : vector<4x16xi32>
    %cst = arith.constant 0.000000e+00 : f32
    %9 = vector.broadcast %cst : f32 to vector<4x2xf32>
    %c0_8 = arith.constant 0 : index
    %c0_9 = arith.constant 0 : index
    %c0_10 = arith.constant 0 : index
    %10 = vector.load %arg1[%c0_8, %c0_9, %c0_10] : memref<1x4x16xf32, #tpu.memory_space<vmem>>, vector<1x4x16xf32>
    %11 = vector.shape_cast %10 : vector<1x4x16xf32> to vector<4x16xf32>
    %12 = tpu.concatenate %9, %11, %9 in 1 : vector<4x2xf32>, vector<4x16xf32>, vector<4x2xf32> -> vector<4x20xf32>
    %13 = vector.extract_strided_slice %12 {offsets = [0, 0], sizes = [4, 16], strides = [1, 1]} : vector<4x20xf32> to vector<4x16xf32>
    %14 = vector.extract_strided_slice %12 {offsets = [0, 1], sizes = [4, 16], strides = [1, 1]} : vector<4x20xf32> to vector<4x16xf32>
    %15 = vector.extract_strided_slice %12 {offsets = [0, 2], sizes = [4, 16], strides = [1, 1]} : vector<4x20xf32> to vector<4x16xf32>
    %16 = vector.extract_strided_slice %12 {offsets = [0, 3], sizes = [4, 16], strides = [1, 1]} : vector<4x20xf32> to vector<4x16xf32>
    %17 = vector.extract_strided_slice %12 {offsets = [0, 4], sizes = [4, 16], strides = [1, 1]} : vector<4x20xf32> to vector<4x16xf32>
    %cst_11 = arith.constant 0.000000e+00 : f32
    %18 = vector.broadcast %cst_11 : f32 to vector<16x16xf32>
    %19 = vector.extract_strided_slice %0 {offsets = [0, 0, 0], sizes = [1, 16, 4], strides = [1, 1, 1]} : vector<5x16x4xf32> to vector<1x16x4xf32>
    %20 = vector.shape_cast %19 : vector<1x16x4xf32> to vector<16x4xf32>
    %cst_12 = arith.constant dense<0.000000e+00> : vector<16x16xf32>
    %21 = tpu.matmul %20, %13, %cst_12 {dimension_numbers = #tpu.dot_dimension_numbers<[1], [0], [0], [1], [0, 0, 1, 1], [], []>} : vector<16x4xf32>, vector<4x16xf32>, vector<16x16xf32> -> vector<16x16xf32>
    %22 = arith.addf %18, %21 : vector<16x16xf32>
    %23 = vector.extract_strided_slice %0 {offsets = [1, 0, 0], sizes = [1, 16, 4], strides = [1, 1, 1]} : vector<5x16x4xf32> to vector<1x16x4xf32>
    %24 = vector.shape_cast %23 : vector<1x16x4xf32> to vector<16x4xf32>
    %cst_13 = arith.constant dense<0.000000e+00> : vector<16x16xf32>
    %25 = tpu.matmul %24, %14, %cst_13 {dimension_numbers = #tpu.dot_dimension_numbers<[1], [0], [0], [1], [0, 0, 1, 1], [], []>} : vector<16x4xf32>, vector<4x16xf32>, vector<16x16xf32> -> vector<16x16xf32>
    %26 = arith.addf %22, %25 : vector<16x16xf32>
    %27 = vector.extract_strided_slice %0 {offsets = [2, 0, 0], sizes = [1, 16, 4], strides = [1, 1, 1]} : vector<5x16x4xf32> to vector<1x16x4xf32>
    %28 = vector.shape_cast %27 : vector<1x16x4xf32> to vector<16x4xf32>
    %cst_14 = arith.constant dense<0.000000e+00> : vector<16x16xf32>
    %29 = tpu.matmul %28, %15, %cst_14 {dimension_numbers = #tpu.dot_dimension_numbers<[1], [0], [0], [1], [0, 0, 1, 1], [], []>} : vector<16x4xf32>, vector<4x16xf32>, vector<16x16xf32> -> vector<16x16xf32>
    %30 = arith.addf %26, %29 : vector<16x16xf32>
    %31 = vector.extract_strided_slice %0 {offsets = [3, 0, 0], sizes = [1, 16, 4], strides = [1, 1, 1]} : vector<5x16x4xf32> to vector<1x16x4xf32>
    %32 = vector.shape_cast %31 : vector<1x16x4xf32> to vector<16x4xf32>
    %cst_15 = arith.constant dense<0.000000e+00> : vector<16x16xf32>
    %33 = tpu.matmul %32, %16, %cst_15 {dimension_numbers = #tpu.dot_dimension_numbers<[1], [0], [0], [1], [0, 0, 1, 1], [], []>} : vector<16x4xf32>, vector<4x16xf32>, vector<16x16xf32> -> vector<16x16xf32>
    %34 = arith.addf %30, %33 : vector<16x16xf32>
    %35 = vector.extract_strided_slice %0 {offsets = [4, 0, 0], sizes = [1, 16, 4], strides = [1, 1, 1]} : vector<5x16x4xf32> to vector<1x16x4xf32>
    %36 = vector.shape_cast %35 : vector<1x16x4xf32> to vector<16x4xf32>
    %cst_16 = arith.constant dense<0.000000e+00> : vector<16x16xf32>
    %37 = tpu.matmul %36, %17, %cst_16 {dimension_numbers = #tpu.dot_dimension_numbers<[1], [0], [0], [1], [0, 0, 1, 1], [], []>} : vector<16x4xf32>, vector<4x16xf32>, vector<16x16xf32> -> vector<16x16xf32>
    %38 = arith.addf %34, %37 : vector<16x16xf32>
    %39 = vector.broadcast %1 : vector<16x1xf32> to vector<16x16xf32>
    %40 = arith.addf %38, %39 : vector<16x16xf32>
    %cst_17 = arith.constant 0.000000e+00 : f32
    %41 = vector.broadcast %cst_17 : f32 to vector<16x16xf32>
    %42 = arith.maximumf %40, %41 : vector<16x16xf32>
    %cst_18 = arith.constant 0xFF800000 : f32
    %43 = vector.broadcast %cst_18 : f32 to vector<4x16xf32>
    %44 = arith.select %6, %43, %14 : vector<4x16xi1>, vector<4x16xf32>
    %cst_19 = arith.constant 0xFF800000 : f32
    %45 = vector.broadcast %cst_19 : f32 to vector<4x16xf32>
    %46 = arith.select %8, %45, %16 : vector<4x16xi1>, vector<4x16xf32>
    %47 = arith.maximumf %44, %15 : vector<4x16xf32>
    %48 = arith.maximumf %47, %46 : vector<4x16xf32>
    %cst_20 = arith.constant dense<0.000000e+00> : vector<4x16xf32>
    %49 = tpu.matmul %2, %48, %cst_20 {dimension_numbers = #tpu.dot_dimension_numbers<[1], [0], [0], [1], [0, 0, 1, 1], [], []>} : vector<4x4xf32>, vector<4x16xf32>, vector<4x16xf32> -> vector<4x16xf32>
    %50 = vector.broadcast %3 : vector<4x1xf32> to vector<4x16xf32>
    %51 = arith.addf %49, %50 : vector<4x16xf32>
    %cst_21 = arith.constant 0.000000e+00 : f32
    %52 = vector.broadcast %cst_21 : f32 to vector<4x16xf32>
    %53 = arith.maximumf %51, %52 : vector<4x16xf32>
    %c0_22 = arith.constant 0 : index
    %c0_23 = arith.constant 0 : index
    %c0_24 = arith.constant 0 : index
    %54 = vector.load %arg6[%c0_22, %c0_23, %c0_24] : memref<1x20x16xf32, #tpu.memory_space<vmem>>, vector<1x16x16xf32>
    %55 = vector.shape_cast %54 : vector<1x16x16xf32> to vector<16x16xf32>
    %56 = vector.shape_cast %42 : vector<16x16xf32> to vector<1x16x16xf32>
    tpu.vector_store %arg6[%c0_22, %c0_23, %c0_24], %56 {strides = array<i32>} : memref<1x20x16xf32, #tpu.memory_space<vmem>>, vector<1x16x16xf32>,
    %c0_25 = arith.constant 0 : index
    %c16 = arith.constant 16 : index
    %c0_26 = arith.constant 0 : index
    %57 = vector.load %arg6[%c0_25, %c16, %c0_26] : memref<1x20x16xf32, #tpu.memory_space<vmem>>, vector<1x4x16xf32>
    %58 = vector.shape_cast %57 : vector<1x4x16xf32> to vector<4x16xf32>
    %59 = vector.shape_cast %53 : vector<4x16xf32> to vector<1x4x16xf32>
    tpu.vector_store %arg6[%c0_25, %c16, %c0_26], %59 {strides = array<i32>} : memref<1x20x16xf32, #tpu.memory_space<vmem>>, vector<1x4x16xf32>,
    return
  }
  func.func @transform_0(%arg0: i32) -> (i32, i32, i32) {
    %c0_i32 = arith.constant 0 : i32
    %c0_i32_0 = arith.constant 0 : i32
    %c0_i32_1 = arith.constant 0 : i32
    return %arg0, %c0_i32, %c0_i32_0 : i32, i32, i32
  }
  func.func @transform_1(%arg0: i32) -> (i32, i32, i32) {
    %c0_i32 = arith.constant 0 : i32
    %c0_i32_0 = arith.constant 0 : i32
    %c0_i32_1 = arith.constant 0 : i32
    %c0_i32_2 = arith.constant 0 : i32
    return %c0_i32, %c0_i32_0, %c0_i32_1 : i32, i32, i32
  }
  func.func @transform_2(%arg0: i32) -> (i32, i32) {
    %c0_i32 = arith.constant 0 : i32
    %c0_i32_0 = arith.constant 0 : i32
    %c0_i32_1 = arith.constant 0 : i32
    return %c0_i32, %c0_i32_0 : i32, i32
  }
  func.func @transform_3(%arg0: i32) -> (i32, i32) {
    %c0_i32 = arith.constant 0 : i32
    %c0_i32_0 = arith.constant 0 : i32
    %c0_i32_1 = arith.constant 0 : i32
    return %c0_i32, %c0_i32_0 : i32, i32
  }
  func.func @transform_4(%arg0: i32) -> (i32, i32) {
    %c0_i32 = arith.constant 0 : i32
    %c0_i32_0 = arith.constant 0 : i32
    %c0_i32_1 = arith.constant 0 : i32
    return %c0_i32, %c0_i32_0 : i32, i32
  }
  func.func @transform_5(%arg0: i32) -> (i32, i32, i32) {
    %c0_i32 = arith.constant 0 : i32
    %c0_i32_0 = arith.constant 0 : i32
    %c0_i32_1 = arith.constant 0 : i32
    return %arg0, %c0_i32, %c0_i32_0 : i32, i32, i32
  }
}

</mosaic_0001>

<llo_original>
// kernel: naive_inception_forward.1
$region0: #{naive_inception_forward.1}
  #allocation0 [shape = 'u32[]', space=smem, size = 0x4, offset = 0x4, fixed_abs, tag = 'smem constant byte address 0x4 - core index']
  #allocation1 [shape = 'u32[144,128]{1,0:T(1,128)}', space=vmem, size = 0x12000, scoped, tag = 'internal scratch']
  %s0 = inlined_call_operand.vmem [shape: f32[2,4,16], index: 0, kind: input, shape index: {}]
  %s1 = inlined_call_operand.vmem [shape: f32[5,16,4], index: 1, kind: input, shape index: {}]
  %s2 = inlined_call_operand.vmem [shape: f32[16,1], index: 2, kind: input, shape index: {}]
  %s3 = inlined_call_operand.vmem [shape: f32[4,4], index: 3, kind: input, shape index: {}]
  %s4 = inlined_call_operand.vmem [shape: f32[4,1], index: 4, kind: input, shape index: {}]
  %s5 = inlined_call_operand.vmem [shape: f32[2,20,16], index: 5, kind: output, shape index: {}]
  %s6 = sld [smem:[#allocation0]]
  $region53: #{naive_inception_forward.1} parent=0
    _
  %s8 = ssub.s32 1, %s6
  %s9 = scalar_select 0, %s8, %s6
  loop: start=0, step=1, limit=4
  $region2: #{naive_inception_forward.1} parent=0 // loop_pre_header
    _
  $region3: #{naive_inception_forward.1} parent=0 // loop_header
    %s11 = sphi 0, %s15
    %p12 = scmp.ge.s32.totalorder %s11, 4
    %s21 = sphi 0, %s23
    %s24 = sphi 0, %s21
    %s25 = sphi 0, %s24
    %s41 = sphi 0, %s25
    %s45 = sphi 0, %s45
    %s47 = sphi 0, %s45
    %s48 = sphi 0, %s47
    %s62 = sphi 0, %s48
    %s66 = sphi 0, %s66
    %s68 = sphi 0, %s66
    %s69 = sphi 0, %s68
    %s83 = sphi 0, %s69
    %s87 = sphi 0, %s87
    %s89 = sphi 0, %s87
    %s90 = sphi 0, %s89
    %s104 = sphi 0, %s90
    %s108 = sphi 0, %s108
    %s110 = sphi 0, %s108
    %s111 = sphi 0, %s110
    %s125 = sphi 0, %s111
    %s131 = sphi 0, %s133
    %s134 = sphi 0, %s131
    %s135 = sphi 0, %s134
    %s151 = sphi 0, %s135
  $region4: #{naive_inception_forward.1} parent=0 // loop_header_branch
    %14 = sbr.rel (%p12) target = $region8
  $region5: #{naive_inception_forward.1} parent=0 // loop_body
    %s16 = ssub.s32 %s11, 1
    %s17 = ssub.s32 %s11, 2
    %s18 = sadd.s32 %s11, 1
    %s19 = ssub.s32 %s11, %s18
    %p20 = scmp.eq.s32.totalorder %s19, 0
    %s22 = sadd.s32 %s21, 1
    %s23 = scalar_select %p20, %s21, %s22
    %p26 = pneg %p20
    %p27 = scmp.eq.s32.totalorder %s11, 1
    %p28 = por %p26, %p27
    %p29 = scmp.ne.s32.totalorder %s21, %s24
    %p30 = scmp.eq.s32.totalorder %s11, 0
    %p31 = por %p29, %p30
    %p32 = scmp.ne.s32.totalorder %s21, %s24
    %p33 = scmp.eq.s32.totalorder %s16, 1
    %p34 = por %p32, %p33
    %p35 = scmp.ne.s32.totalorder %s24, %s25
    %p36 = scmp.eq.s32.totalorder %s16, 0
    %p37 = por %p35, %p36
    %p38 = scmp.ne.s32.totalorder %s24, %s25
    %p39 = scmp.eq.s32.totalorder %s17, 1
    %p40 = por %p38, %p39
    %p42 = scmp.ne.s32.totalorder %s25, %s41
    %p43 = scmp.eq.s32.totalorder %s17, 0
    %p44 = por %p42, %p43
    %s46 = sadd.s32 %s45, 1
    %p49 = scmp.eq.s32.totalorder %s11, 1
    %p50 = scmp.ne.s32.totalorder %s45, %s47
    %p51 = scmp.eq.s32.totalorder %s11, 0
    %p52 = por %p50, %p51
    %p53 = scmp.ne.s32.totalorder %s45, %s47
    %p54 = scmp.eq.s32.totalorder %s16, 1
    %p55 = por %p53, %p54
    %p56 = scmp.ne.s32.totalorder %s47, %s48
    %p57 = scmp.eq.s32.totalorder %s16, 0
    %p58 = por %p56, %p57
    %p59 = scmp.ne.s32.totalorder %s47, %s48
    %p60 = scmp.eq.s32.totalorder %s17, 1
    %p61 = por %p59, %p60
    %p63 = scmp.ne.s32.totalorder %s48, %s62
    %p64 = scmp.eq.s32.totalorder %s17, 0
    %p65 = por %p63, %p64
    %s67 = sadd.s32 %s66, 1
    %p70 = scmp.eq.s32.totalorder %s11, 1
    %p71 = scmp.ne.s32.totalorder %s66, %s68
    %p72 = scmp.eq.s32.totalorder %s11, 0
    %p73 = por %p71, %p72
    %p74 = scmp.ne.s32.totalorder %s66, %s68
    %p75 = scmp.eq.s32.totalorder %s16, 1
    %p76 = por %p74, %p75
    %p77 = scmp.ne.s32.totalorder %s68, %s69
    %p78 = scmp.eq.s32.totalorder %s16, 0
    %p79 = por %p77, %p78
    %p80 = scmp.ne.s32.totalorder %s68, %s69
    %p81 = scmp.eq.s32.totalorder %s17, 1
    %p82 = por %p80, %p81
    %p84 = scmp.ne.s32.totalorder %s69, %s83
    %p85 = scmp.eq.s32.totalorder %s17, 0
    %p86 = por %p84, %p85
    %s88 = sadd.s32 %s87, 1
    %p91 = scmp.eq.s32.totalorder %s11, 1
    %p92 = scmp.ne.s32.totalorder %s87, %s89
    %p93 = scmp.eq.s32.totalorder %s11, 0
    %p94 = por %p92, %p93
    %p95 = scmp.ne.s32.totalorder %s87, %s89
    %p96 = scmp.eq.s32.totalorder %s16, 1
    %p97 = por %p95, %p96
    %p98 = scmp.ne.s32.totalorder %s89, %s90
    %p99 = scmp.eq.s32.totalorder %s16, 0
    %p100 = por %p98, %p99
    %p101 = scmp.ne.s32.totalorder %s89, %s90
    %p102 = scmp.eq.s32.totalorder %s17, 1
    %p103 = por %p101, %p102
    %p105 = scmp.ne.s32.totalorder %s90, %s104
    %p106 = scmp.eq.s32.totalorder %s17, 0
    %p107 = por %p105, %p106
    %s109 = sadd.s32 %s108, 1
    %p112 = scmp.eq.s32.totalorder %s11, 1
    %p113 = scmp.ne.s32.totalorder %s108, %s110
    %p114 = scmp.eq.s32.totalorder %s11, 0
    %p115 = por %p113, %p114
    %p116 = scmp.ne.s32.totalorder %s108, %s110
    %p117 = scmp.eq.s32.totalorder %s16, 1
    %p118 = por %p116, %p117
    %p119 = scmp.ne.s32.totalorder %s110, %s111
    %p120 = scmp.eq.s32.totalorder %s16, 0
    %p121 = por %p119, %p120
    %p122 = scmp.ne.s32.totalorder %s110, %s111
    %p123 = scmp.eq.s32.totalorder %s17, 1
    %p124 = por %p122, %p123
    %p126 = scmp.ne.s32.totalorder %s111, %s125
    %p127 = scmp.eq.s32.totalorder %s17, 0
    %p128 = por %p126, %p127
    %s129 = ssub.s32 %s11, %s18
    %p130 = scmp.eq.s32.totalorder %s129, 0
    %s132 = sadd.s32 %s131, 1
    %s133 = scalar_select %p130, %s131, %s132
    %p136 = pneg %p130
    %p137 = scmp.eq.s32.totalorder %s11, 1
    %p138 = por %p136, %p137
    %p139 = scmp.ne.s32.totalorder %s131, %s134
    %p140 = scmp.eq.s32.totalorder %s11, 0
    %p141 = por %p139, %p140
    %p142 = scmp.ne.s32.totalorder %s131, %s134
    %p143 = scmp.eq.s32.totalorder %s16, 1
    %p144 = por %p142, %p143
    %p145 = scmp.ne.s32.totalorder %s134, %s135
    %p146 = scmp.eq.s32.totalorder %s16, 0
    %p147 = por %p145, %p146
    %p148 = scmp.ne.s32.totalorder %s134, %s135
    %p149 = scmp.eq.s32.totalorder %s17, 1
    %p150 = por %p148, %p149
    %p152 = scmp.ne.s32.totalorder %s135, %s151
    %p153 = scmp.eq.s32.totalorder %s17, 0
    %p154 = por %p152, %p153
    %p155 = scmp.le.s32.totalorder 1, %s11
    %p156 = scmp.lt.s32.totalorder %s11, 3
    %p157 = pnand %p155, %p156
    %p158 = pneg %p157
    // Predicated region
    $region9: #{naive_inception_forward.1} parent=5 // pred_check
      _
    $region10: #{naive_inception_forward.1} parent=5 // pred_check_branch
      %160 = sbr.rel (%p157) target = $region12
    $region11: #{naive_inception_forward.1} parent=5 // pred_region
      %s161 = ssub.s32 %s11, 1
      // Predicated region
      $region13: #{naive_inception_forward.1} parent=11 // pred_check
        %p162 = pneg %p58
      $region14: #{naive_inception_forward.1} parent=11 // pred_check_branch
        %164 = sbr.rel (%p162) target = $region16
      $region15: #{naive_inception_forward.1} parent=11 // pred_region
        _
      $region16: #{naive_inception_forward.1} parent=11 // pred_fallthru
        _
      // Predicated region
      $region17: #{naive_inception_forward.1} parent=11 // pred_check
        %p165 = pneg %p79
      $region18: #{naive_inception_forward.1} parent=11 // pred_check_branch
        %167 = sbr.rel (%p165) target = $region20
      $region19: #{naive_inception_forward.1} parent=11 // pred_region
        _
      $region20: #{naive_inception_forward.1} parent=11 // pred_fallthru
        _
      // Predicated region
      $region21: #{naive_inception_forward.1} parent=11 // pred_check
        %p168 = pneg %p100
      $region22: #{naive_inception_forward.1} parent=11 // pred_check_branch
        %170 = sbr.rel (%p168) target = $region24
      $region23: #{naive_inception_forward.1} parent=11 // pred_region
        _
      $region24: #{naive_inception_forward.1} parent=11 // pred_fallthru
        _
      // Predicated region
      $region25: #{naive_inception_forward.1} parent=11 // pred_check
        %p171 = pneg %p121
      $region26: #{naive_inception_forward.1} parent=11 // pred_check_branch
        %173 = sbr.rel (%p171) target = $region28
      $region27: #{naive_inception_forward.1} parent=11 // pred_region
        _
      $region28: #{naive_inception_forward.1} parent=11 // pred_fallthru
        _
    $region12: #{naive_inception_forward.1} parent=5 // pred_fallthru
      _
    %p174 = scmp.lt.s32.totalorder %s11, 2
    // Predicated region
    $region29: #{naive_inception_forward.1} parent=5 // pred_check
      %p175 = pneg %p174
    $region30: #{naive_inception_forward.1} parent=5 // pred_check_branch
      %177 = sbr.rel (%p175) target = $region32
    $region31: #{naive_inception_forward.1} parent=5 // pred_region
      // Predicated region
      $region33: #{naive_inception_forward.1} parent=31 // pred_check
        %p178 = pneg %p31
      $region34: #{naive_inception_forward.1} parent=31 // pred_check_branch
        %180 = sbr.rel (%p178) target = $region36
      $region35: #{naive_inception_forward.1} parent=31 // pred_region
        %p181 = scmp.lt.s32.totalorder %s11, 1
        %s182 = scalar_select %p181, %s11, 1
        %s183 = smul.addr %s182, 4
        %s184 = scalar_lea.vmem %s0, %s183
      $region36: #{naive_inception_forward.1} parent=31 // pred_fallthru
        _
    $region32: #{naive_inception_forward.1} parent=5 // pred_fallthru
      _
    %p185 = scmp.le.s32.totalorder 1, %s11
    %p186 = scmp.lt.s32.totalorder %s11, 3
    %p187 = pnand %p185, %p186
    %p188 = pneg %p187
    // Predicated region
    $region37: #{naive_inception_forward.1} parent=5 // pred_check
      _
    $region38: #{naive_inception_forward.1} parent=5 // pred_check_branch
      %190 = sbr.rel (%p187) target = $region40
    $region39: #{naive_inception_forward.1} parent=5 // pred_region
      %s191 = ssub.s32 %s11, 1
      %p192 = scmp.lt.s32.totalorder %s16, 1
      %s193 = scalar_select %p192, %s16, 1
      %s194 = smul.addr %s193, 4
      %s195 = scalar_lea.vmem %s0, %s194
      %p196 = pneg %p37
      %p197 = pneg %p34
      %p198 = pneg %p58
      %p199 = pneg %p55
      %p200 = pneg %p79
      %p201 = pneg %p76
      %p202 = pneg %p100
      %p203 = pneg %p97
      %p204 = pneg %p121
      %p205 = pneg %p118
      %p206 = pneg %p147
      %p207 = pneg %p144
      %p208 = scmp.lt.s32.totalorder %s16, 1
      %s209 = scalar_select %p208, %s16, 1
      %s210 = smul.addr %s209, 3
      %s211 = smul.addr %s210, 8
      %s212 = scalar_lea.vmem %s5, %s211
      %p213 = scmp.lt.s32.totalorder %s16, 1
      %s214 = scalar_select %p213, %s16, 1
      %s215 = smul.addr %s214, 4
      %s216 = scalar_lea.vmem %s0, %s215
      %p217 = scmp.lt.s32.totalorder %s16, 1
      %s218 = scalar_select %p217, %s16, 1
      %s219 = smul.addr %s218, 3
      %s220 = smul.addr %s219, 8
      %s221 = scalar_lea.vmem %s5, %s220
      %v222 = vld [vmem:[%s1] sm:$0xff]
      %v223 = vld [vmem:[%s1 + $0x8] sm:$0xff]
      %v224 = vld [vmem:[%s1 + $0x10] sm:$0xff]
      %v225 = vld [vmem:[%s1 + $0x18] sm:$0xff]
      %v226 = vld [vmem:[%s1 + $0x20] sm:$0xff]
      %v227 = vld [vmem:[%s1 + $0x28] sm:$0xff]
      %v228 = vld [vmem:[%s1 + $0x30] sm:$0xff]
      %v229 = vld [vmem:[%s1 + $0x38] sm:$0xff]
      %v230 = vld [vmem:[%s1 + $0x40] sm:$0xff]
      %v231 = vld [vmem:[%s1 + $0x48] sm:$0xff]
      %v232 = vld [vmem:[%s2] sm:$0xff]
      %v233 = vld [vmem:[%s2 + $0x8] sm:$0xff]
      %v234 = vld [vmem:[%s3] sm:$0xf]
      %v235 = vld [vmem:[%s4] sm:$0xf]
      %v236 = vlaneseq
      %v237 = vand.u32 %v236, 127
      %vm238 = vcmp.eq.s32.totalorder %v237, 0
      %vm239 = vcmp.eq.s32.totalorder %v237, 15
      %v240 = vld [vmem:[%s216] sm:$0xf]
      %242 = vrot.lane.b32.xlu0 %v240, 2
      %v243 = vpop.permute.xlu0 %242
      %vm245 = vcmask 15360
      %v246 = vsel %vm245, 0.0, %v243
      %vm247 = vcmask 146432
      %v248 = vsel %vm247, %v246, 0.0
      %250 = vrot.lane.b32.xlu0 %v248, 127
      %v251 = vpop.permute.xlu0 %250
      %vm252 = vcmask 31744
      %v254 = vsel %vm252, %v224, 0
      %v257 = vsel %vm252, %v225, 0
      %vm259 = vcmask 1043456
      %v260 = vsel %vm259, %v251, 0
      %262 = vmatprep.subr.mxu0 0.0
      %263 = vmatpush1.msra.mxu0 %v260
      %264 = vmatprep.subr.mxu0 0.0
      %265 = vmatpush1.msra.mxu0 0.0
      %266 = vmatprep.subr.mxu0 0.0
      %267 = vmatpush1.msra.mxu0 0.0
      %268 = vmatprep.subr.mxu0 0.0
      %269 = vmatpush1.msra.mxu0 0.0
      %270 = vmatprep.subr.mxu0 0.0
      %271 = vmatpush1.msra.mxu0 0.0
      %272 = vmatprep.subr.mxu0 0.0
      %273 = vmatpush1.msra.mxu0 0.0
      %274 = vmatprep.subr.mxu0 0.0
      %275 = vmatpush1.msra.mxu0 0.0
      %276 = vmatprep.subr.mxu0 0.0
      %277 = vmatpush1.msra.mxu0 0.0
      %278 = vmatprep.subr.mxu0 0.0
      %279 = vmatpush1.msra.mxu0 0.0
      %280 = vmatprep.subr.mxu0 0.0
      %281 = vmatpush1.msra.mxu0 0.0
      %282 = vmatprep.subr.mxu0 0.0
      %283 = vmatpush1.msra.mxu0 0.0
      %284 = vmatprep.subr.mxu0 0.0
      %285 = vmatpush1.msra.mxu0 0.0
      %286 = vmatprep.subr.mxu0 0.0
      %287 = vmatpush1.msra.mxu0 0.0
      %288 = vmatprep.subr.mxu0 0.0
      %289 = vmatpush1.msra.mxu0 0.0
      %290 = vmatprep.subr.mxu0 0.0
      %291 = vmatpush1.msra.mxu0 0.0
      %292 = vmatprep.subr.mxu0 0.0
      %293 = vmatpush1.msra.mxu0 0.0
      %294 = vmatprep.subr.mxu0 0.0
      %295 = vmatpush1.msra.mxu0 0.0
      %296 = vmatprep.subr.mxu0 0.0
      %297 = vmatpush1.msra.mxu0 0.0
      %298 = vmatprep.subr.mxu0 0.0
      %299 = vmatpush1.msra.mxu0 0.0
      %300 = vmatprep.subr.mxu0 0.0
      %301 = vmatpush1.msra.mxu0 0.0
      %302 = vmatprep.subr.mxu0 0.0
      %303 = vmatpush1.msra.mxu0 0.0
      %304 = vmatprep.subr.mxu0 0.0
      %305 = vmatpush1.msra.mxu0 0.0
      %306 = vmatprep.subr.mxu0 0.0
      %307 = vmatpush1.msra.mxu0 0.0
      %308 = vmatprep.subr.mxu0 0.0
      %309 = vmatpush1.msra.mxu0 0.0
      %310 = vmatprep.subr.mxu0 0.0
      %311 = vmatpush1.msra.mxu0 0.0
      %312 = vmatprep.subr.mxu0 0.0
      %313 = vmatpush1.msra.mxu0 0.0
      %314 = vmatprep.subr.mxu0 0.0
      %315 = vmatpush1.msra.mxu0 0.0
      %316 = vmatprep.subr.mxu0 0.0
      %317 = vmatpush1.msra.mxu0 0.0
      %318 = vmatprep.subr.mxu0 0.0
      %319 = vmatpush1.msra.mxu0 0.0
      %320 = vmatprep.subr.mxu0 0.0
      %321 = vmatpush1.msra.mxu0 0.0
      %322 = vmatprep.subr.mxu0 0.0
      %323 = vmatpush1.msra.mxu0 0.0
      %324 = vmatprep.subr.mxu0 0.0
      %325 = vmatpush1.msra.mxu0 0.0
      %326 = vmatprep.mubr.f32.mxu0 0.0
      %327 = vmatmul.mubr.f32.gmra.mrb[0].mxu0 %v254
      %v328 = vpop.f32.mrb[0].mxu0
      %v329 = vadd.f32 0.0, %v328
      %v330 = vpop.f32.mrb[0].mxu0
      %331 = vmatprep.mubr.f32.mxu0 0.0
      %332 = vmatmul.mubr.f32.gmra.mrb[0].mxu0 %v257
      %v333 = vpop.f32.mrb[0].mxu0
      %v334 = vadd.f32 0.0, %v333
      %v335 = vpop.f32.mrb[0].mxu0
      %336 = vdwg.mxu0
      %v338 = vsel %vm252, %v222, 0
      %v341 = vsel %vm252, %v223, 0
      %v343 = vsel %vm259, %v248, 0
      %345 = vmatprep.subr.mxu0 0.0
      %346 = vmatpush1.msra.mxu0 %v343
      %347 = vmatprep.subr.mxu0 0.0
      %348 = vmatpush1.msra.mxu0 0.0
      %349 = vmatprep.subr.mxu0 0.0
      %350 = vmatpush1.msra.mxu0 0.0
      %351 = vmatprep.subr.mxu0 0.0
      %352 = vmatpush1.msra.mxu0 0.0
      %353 = vmatprep.subr.mxu0 0.0
      %354 = vmatpush1.msra.mxu0 0.0
      %355 = vmatprep.subr.mxu0 0.0
      %356 = vmatpush1.msra.mxu0 0.0
      %357 = vmatprep.subr.mxu0 0.0
      %358 = vmatpush1.msra.mxu0 0.0
      %359 = vmatprep.subr.mxu0 0.0
      %360 = vmatpush1.msra.mxu0 0.0
      %361 = vmatprep.subr.mxu0 0.0
      %362 = vmatpush1.msra.mxu0 0.0
      %363 = vmatprep.subr.mxu0 0.0
      %364 = vmatpush1.msra.mxu0 0.0
      %365 = vmatprep.subr.mxu0 0.0
      %366 = vmatpush1.msra.mxu0 0.0
      %367 = vmatprep.subr.mxu0 0.0
      %368 = vmatpush1.msra.mxu0 0.0
      %369 = vmatprep.subr.mxu0 0.0
      %370 = vmatpush1.msra.mxu0 0.0
      %371 = vmatprep.subr.mxu0 0.0
      %372 = vmatpush1.msra.mxu0 0.0
      %373 = vmatprep.subr.mxu0 0.0
      %374 = vmatpush1.msra.mxu0 0.0
      %375 = vmatprep.subr.mxu0 0.0
      %376 = vmatpush1.msra.mxu0 0.0
      %377 = vmatprep.subr.mxu0 0.0
      %378 = vmatpush1.msra.mxu0 0.0
      %379 = vmatprep.subr.mxu0 0.0
      %380 = vmatpush1.msra.mxu0 0.0
      %381 = vmatprep.subr.mxu0 0.0
      %382 = vmatpush1.msra.mxu0 0.0
      %383 = vmatprep.subr.mxu0 0.0
      %384 = vmatpush1.msra.mxu0 0.0
      %385 = vmatprep.subr.mxu0 0.0
      %386 = vmatpush1.msra.mxu0 0.0
      %387 = vmatprep.subr.mxu0 0.0
      %388 = vmatpush1.msra.mxu0 0.0
      %389 = vmatprep.subr.mxu0 0.0
      %390 = vmatpush1.msra.mxu0 0.0
      %391 = vmatprep.subr.mxu0 0.0
      %392 = vmatpush1.msra.mxu0 0.0
      %393 = vmatprep.subr.mxu0 0.0
      %394 = vmatpush1.msra.mxu0 0.0
      %395 = vmatprep.subr.mxu0 0.0
      %396 = vmatpush1.msra.mxu0 0.0
      %397 = vmatprep.subr.mxu0 0.0
      %398 = vmatpush1.msra.mxu0 0.0
      %399 = vmatprep.subr.mxu0 0.0
      %400 = vmatpush1.msra.mxu0 0.0
      %401 = vmatprep.subr.mxu0 0.0
      %402 = vmatpush1.msra.mxu0 0.0
      %403 = vmatprep.subr.mxu0 0.0
      %404 = vmatpush1.msra.mxu0 0.0
      %405 = vmatprep.subr.mxu0 0.0
      %406 = vmatpush1.msra.mxu0 0.0
      %407 = vmatprep.subr.mxu0 0.0
      %408 = vmatpush1.msra.mxu0 0.0
      %409 = vmatprep.mubr.f32.mxu0 0.0
      %410 = vmatmul.mubr.f32.gmra.mrb[0].mxu0 %v338
      %v411 = vpop.f32.mrb[0].mxu0
      %v412 = vadd.f32 %v329, %v411
      %v413 = vpop.f32.mrb[0].mxu0
      %414 = vmatprep.mubr.f32.mxu0 0.0
      %415 = vmatmul.mubr.f32.gmra.mrb[0].mxu0 %v341
      %v416 = vpop.f32.mrb[0].mxu0
      %v417 = vadd.f32 %v334, %v416
      %v418 = vpop.f32.mrb[0].mxu0
      %419 = vdwg.mxu0
      %420 = vrot.lane.b32.xlu0 %v248, 126
      %v421 = vpop.permute.xlu0 %420
      %v423 = vsel %vm252, %v226, 0
      %v426 = vsel %vm252, %v227, 0
      %v428 = vsel %vm259, %v421, 0
      %430 = vmatprep.subr.mxu0 0.0
      %431 = vmatpush1.msra.mxu0 %v428
      %432 = vmatprep.subr.mxu0 0.0
      %433 = vmatpush1.msra.mxu0 0.0
      %434 = vmatprep.subr.mxu0 0.0
      %435 = vmatpush1.msra.mxu0 0.0
      %436 = vmatprep.subr.mxu0 0.0
      %437 = vmatpush1.msra.mxu0 0.0
      %438 = vmatprep.subr.mxu0 0.0
      %439 = vmatpush1.msra.mxu0 0.0
      %440 = vmatprep.subr.mxu0 0.0
      %441 = vmatpush1.msra.mxu0 0.0
      %442 = vmatprep.subr.mxu0 0.0
      %443 = vmatpush1.msra.mxu0 0.0
      %444 = vmatprep.subr.mxu0 0.0
      %445 = vmatpush1.msra.mxu0 0.0
      %446 = vmatprep.subr.mxu0 0.0
      %447 = vmatpush1.msra.mxu0 0.0
      %448 = vmatprep.subr.mxu0 0.0
      %449 = vmatpush1.msra.mxu0 0.0
      %450 = vmatprep.subr.mxu0 0.0
      %451 = vmatpush1.msra.mxu0 0.0
      %452 = vmatprep.subr.mxu0 0.0
      %453 = vmatpush1.msra.mxu0 0.0
      %454 = vmatprep.subr.mxu0 0.0
      %455 = vmatpush1.msra.mxu0 0.0
      %456 = vmatprep.subr.mxu0 0.0
      %457 = vmatpush1.msra.mxu0 0.0
      %458 = vmatprep.subr.mxu0 0.0
      %459 = vmatpush1.msra.mxu0 0.0
      %460 = vmatprep.subr.mxu0 0.0
      %461 = vmatpush1.msra.mxu0 0.0
      %462 = vmatprep.subr.mxu0 0.0
      %463 = vmatpush1.msra.mxu0 0.0
      %464 = vmatprep.subr.mxu0 0.0
      %465 = vmatpush1.msra.mxu0 0.0
      %466 = vmatprep.subr.mxu0 0.0
      %467 = vmatpush1.msra.mxu0 0.0
      %468 = vmatprep.subr.mxu0 0.0
      %469 = vmatpush1.msra.mxu0 0.0
      %470 = vmatprep.subr.mxu0 0.0
      %471 = vmatpush1.msra.mxu0 0.0
      %472 = vmatprep.subr.mxu0 0.0
      %473 = vmatpush1.msra.mxu0 0.0
      %474 = vmatprep.subr.mxu0 0.0
      %475 = vmatpush1.msra.mxu0 0.0
      %476 = vmatprep.subr.mxu0 0.0
      %477 = vmatpush1.msra.mxu0 0.0
      %478 = vmatprep.subr.mxu0 0.0
      %479 = vmatpush1.msra.mxu0 0.0
      %480 = vmatprep.subr.mxu0 0.0
      %481 = vmatpush1.msra.mxu0 0.0
      %482 = vmatprep.subr.mxu0 0.0
      %483 = vmatpush1.msra.mxu0 0.0
      %484 = vmatprep.subr.mxu0 0.0
      %485 = vmatpush1.msra.mxu0 0.0
      %486 = vmatprep.subr.mxu0 0.0
      %487 = vmatpush1.msra.mxu0 0.0
      %488 = vmatprep.subr.mxu0 0.0
      %489 = vmatpush1.msra.mxu0 0.0
      %490 = vmatprep.subr.mxu0 0.0
      %491 = vmatpush1.msra.mxu0 0.0
      %492 = vmatprep.subr.mxu0 0.0
      %493 = vmatpush1.msra.mxu0 0.0
      %494 = vmatprep.mubr.f32.mxu0 0.0
      %495 = vmatmul.mubr.f32.gmra.mrb[0].mxu0 %v423
      %v496 = vpop.f32.mrb[0].mxu0
      %v497 = vadd.f32 0.0, %v496
      %v498 = vpop.f32.mrb[0].mxu0
      %499 = vmatprep.mubr.f32.mxu0 0.0
      %500 = vmatmul.mubr.f32.gmra.mrb[0].mxu0 %v426
      %v501 = vpop.f32.mrb[0].mxu0
      %v502 = vadd.f32 0.0, %v501
      %v503 = vpop.f32.mrb[0].mxu0
      %504 = vdwg.mxu0
      %v505 = vadd.f32 %v412, %v497
      %v506 = vadd.f32 %v417, %v502
      %507 = vrot.lane.b32.xlu0 %v248, 125
      %v508 = vpop.permute.xlu0 %507
      %v510 = vsel %vm252, %v228, 0
      %v513 = vsel %vm252, %v229, 0
      %v515 = vsel %vm259, %v508, 0
      %517 = vmatprep.subr.mxu0 0.0
      %518 = vmatpush1.msra.mxu0 %v515
      %519 = vmatprep.subr.mxu0 0.0
      %520 = vmatpush1.msra.mxu0 0.0
      %521 = vmatprep.subr.mxu0 0.0
      %522 = vmatpush1.msra.mxu0 0.0
      %523 = vmatprep.subr.mxu0 0.0
      %524 = vmatpush1.msra.mxu0 0.0
      %525 = vmatprep.subr.mxu0 0.0
      %526 = vmatpush1.msra.mxu0 0.0
      %527 = vmatprep.subr.mxu0 0.0
      %528 = vmatpush1.msra.mxu0 0.0
      %529 = vmatprep.subr.mxu0 0.0
      %530 = vmatpush1.msra.mxu0 0.0
      %531 = vmatprep.subr.mxu0 0.0
      %532 = vmatpush1.msra.mxu0 0.0
      %533 = vmatprep.subr.mxu0 0.0
      %534 = vmatpush1.msra.mxu0 0.0
      %535 = vmatprep.subr.mxu0 0.0
      %536 = vmatpush1.msra.mxu0 0.0
      %537 = vmatprep.subr.mxu0 0.0
      %538 = vmatpush1.msra.mxu0 0.0
      %539 = vmatprep.subr.mxu0 0.0
      %540 = vmatpush1.msra.mxu0 0.0
      %541 = vmatprep.subr.mxu0 0.0
      %542 = vmatpush1.msra.mxu0 0.0
      %543 = vmatprep.subr.mxu0 0.0
      %544 = vmatpush1.msra.mxu0 0.0
      %545 = vmatprep.subr.mxu0 0.0
      %546 = vmatpush1.msra.mxu0 0.0
      %547 = vmatprep.subr.mxu0 0.0
      %548 = vmatpush1.msra.mxu0 0.0
      %549 = vmatprep.subr.mxu0 0.0
      %550 = vmatpush1.msra.mxu0 0.0
      %551 = vmatprep.subr.mxu0 0.0
      %552 = vmatpush1.msra.mxu0 0.0
      %553 = vmatprep.subr.mxu0 0.0
      %554 = vmatpush1.msra.mxu0 0.0
      %555 = vmatprep.subr.mxu0 0.0
      %556 = vmatpush1.msra.mxu0 0.0
      %557 = vmatprep.subr.mxu0 0.0
      %558 = vmatpush1.msra.mxu0 0.0
      %559 = vmatprep.subr.mxu0 0.0
      %560 = vmatpush1.msra.mxu0 0.0
      %561 = vmatprep.subr.mxu0 0.0
      %562 = vmatpush1.msra.mxu0 0.0
      %563 = vmatprep.subr.mxu0 0.0
      %564 = vmatpush1.msra.mxu0 0.0
      %565 = vmatprep.subr.mxu0 0.0
      %566 = vmatpush1.msra.mxu0 0.0
      %567 = vmatprep.subr.mxu0 0.0
      %568 = vmatpush1.msra.mxu0 0.0
      %569 = vmatprep.subr.mxu0 0.0
      %570 = vmatpush1.msra.mxu0 0.0
      %571 = vmatprep.subr.mxu0 0.0
      %572 = vmatpush1.msra.mxu0 0.0
      %573 = vmatprep.subr.mxu0 0.0
      %574 = vmatpush1.msra.mxu0 0.0
      %575 = vmatprep.subr.mxu0 0.0
      %576 = vmatpush1.msra.mxu0 0.0
      %577 = vmatprep.subr.mxu0 0.0
      %578 = vmatpush1.msra.mxu0 0.0
      %579 = vmatprep.subr.mxu0 0.0
      %580 = vmatpush1.msra.mxu0 0.0
      %581 = vmatprep.mubr.f32.mxu0 0.0
      %582 = vmatmul.mubr.f32.gmra.mrb[0].mxu0 %v510
      %v583 = vpop.f32.mrb[0].mxu0
      %v584 = vadd.f32 0.0, %v583
      %v585 = vpop.f32.mrb[0].mxu0
      %586 = vmatprep.mubr.f32.mxu0 0.0
      %587 = vmatmul.mubr.f32.gmra.mrb[0].mxu0 %v513
      %v588 = vpop.f32.mrb[0].mxu0
      %v589 = vadd.f32 0.0, %v588
      %v590 = vpop.f32.mrb[0].mxu0
      %591 = vdwg.mxu0
      %v592 = vadd.f32 %v505, %v584
      %v593 = vadd.f32 %v506, %v589
      %594 = vrot.lane.b32.xlu0 %v248, 124
      %v595 = vpop.permute.xlu0 %594
      %v597 = vsel %vm252, %v230, 0
      %v600 = vsel %vm252, %v231, 0
      %v602 = vsel %vm259, %v595, 0
      %604 = vmatprep.subr.mxu0 0.0
      %605 = vmatpush1.msra.mxu0 %v602
      %606 = vmatprep.subr.mxu0 0.0
      %607 = vmatpush1.msra.mxu0 0.0
      %608 = vmatprep.subr.mxu0 0.0
      %609 = vmatpush1.msra.mxu0 0.0
      %610 = vmatprep.subr.mxu0 0.0
      %611 = vmatpush1.msra.mxu0 0.0
      %612 = vmatprep.subr.mxu0 0.0
      %613 = vmatpush1.msra.mxu0 0.0
      %614 = vmatprep.subr.mxu0 0.0
      %615 = vmatpush1.msra.mxu0 0.0
      %616 = vmatprep.subr.mxu0 0.0
      %617 = vmatpush1.msra.mxu0 0.0
      %618 = vmatprep.subr.mxu0 0.0
      %619 = vmatpush1.msra.mxu0 0.0
      %620 = vmatprep.subr.mxu0 0.0
      %621 = vmatpush1.msra.mxu0 0.0
      %622 = vmatprep.subr.mxu0 0.0
      %623 = vmatpush1.msra.mxu0 0.0
      %624 = vmatprep.subr.mxu0 0.0
      %625 = vmatpush1.msra.mxu0 0.0
      %626 = vmatprep.subr.mxu0 0.0
      %627 = vmatpush1.msra.mxu0 0.0
      %628 = vmatprep.subr.mxu0 0.0
      %629 = vmatpush1.msra.mxu0 0.0
      %630 = vmatprep.subr.mxu0 0.0
      %631 = vmatpush1.msra.mxu0 0.0
      %632 = vmatprep.subr.mxu0 0.0
      %633 = vmatpush1.msra.mxu0 0.0
      %634 = vmatprep.subr.mxu0 0.0
      %635 = vmatpush1.msra.mxu0 0.0
      %636 = vmatprep.subr.mxu0 0.0
      %637 = vmatpush1.msra.mxu0 0.0
      %638 = vmatprep.subr.mxu0 0.0
      %639 = vmatpush1.msra.mxu0 0.0
      %640 = vmatprep.subr.mxu0 0.0
      %641 = vmatpush1.msra.mxu0 0.0
      %642 = vmatprep.subr.mxu0 0.0
      %643 = vmatpush1.msra.mxu0 0.0
      %644 = vmatprep.subr.mxu0 0.0
      %645 = vmatpush1.msra.mxu0 0.0
      %646 = vmatprep.subr.mxu0 0.0
      %647 = vmatpush1.msra.mxu0 0.0
      %648 = vmatprep.subr.mxu0 0.0
      %649 = vmatpush1.msra.mxu0 0.0
      %650 = vmatprep.subr.mxu0 0.0
      %651 = vmatpush1.msra.mxu0 0.0
      %652 = vmatprep.subr.mxu0 0.0
      %653 = vmatpush1.msra.mxu0 0.0
      %654 = vmatprep.subr.mxu0 0.0
      %655 = vmatpush1.msra.mxu0 0.0
      %656 = vmatprep.subr.mxu0 0.0
      %657 = vmatpush1.msra.mxu0 0.0
      %658 = vmatprep.subr.mxu0 0.0
      %659 = vmatpush1.msra.mxu0 0.0
      %660 = vmatprep.subr.mxu0 0.0
      %661 = vmatpush1.msra.mxu0 0.0
      %662 = vmatprep.subr.mxu0 0.0
      %663 = vmatpush1.msra.mxu0 0.0
      %664 = vmatprep.subr.mxu0 0.0
      %665 = vmatpush1.msra.mxu0 0.0
      %666 = vmatprep.subr.mxu0 0.0
      %667 = vmatpush1.msra.mxu0 0.0
      %668 = vmatprep.mubr.f32.mxu0 0.0
      %669 = vmatmul.mubr.f32.gmra.mrb[0].mxu0 %v597
      %v670 = vpop.f32.mrb[0].mxu0
      %v671 = vadd.f32 0.0, %v670
      %v672 = vpop.f32.mrb[0].mxu0
      %673 = vmatprep.mubr.f32.mxu0 0.0
      %674 = vmatmul.mubr.f32.gmra.mrb[0].mxu0 %v600
      %v675 = vpop.f32.mrb[0].mxu0
      %v676 = vadd.f32 0.0, %v675
      %v677 = vpop.f32.mrb[0].mxu0
      %678 = vdwg.mxu0
      %v679 = vadd.f32 %v592, %v671
      %v680 = vadd.f32 %v593, %v676
      %682 = vset.pattern.permute.xlu0 0
      %683 = vperm.xlu0 %682, %v232
      %v684 = vpop.permute.xlu0 %683
      %687 = vset.pattern.permute.xlu0 0
      %688 = vperm.xlu0 %687, %v233
      %v689 = vpop.permute.xlu0 %688
      %v691 = vadd.f32 %v679, %v684
      %v692 = vadd.f32 %v680, %v689
      %v693 = vmax.f32 %v691, 0.0
      %v694 = vmax.f32 %v692, 0.0
      %v696 = vsel %vm238, -inf, %v251
      %v698 = vsel %vm239, -inf, %v508
      %v700 = vmax.f32 %v696, %v421
      %v701 = vmax.f32 %v700, %v698
      %703 = vset.pattern.permute.xlu0 0
      %704 = vperm.xlu0 %703, %v235
      %v705 = vpop.permute.xlu0 %704
      %v708 = vsel %vm252, %v234, 0
      %v711 = vsel %vm259, %v701, 0
      %713 = vmatprep.subr.mxu0 0.0
      %714 = vmatpush1.msra.mxu0 %v711
      %715 = vmatprep.subr.mxu0 0.0
      %716 = vmatpush1.msra.mxu0 0.0
      %717 = vmatprep.subr.mxu0 0.0
      %718 = vmatpush1.msra.mxu0 0.0
      %719 = vmatprep.subr.mxu0 0.0
      %720 = vmatpush1.msra.mxu0 0.0
      %721 = vmatprep.subr.mxu0 0.0
      %722 = vmatpush1.msra.mxu0 0.0
      %723 = vmatprep.subr.mxu0 0.0
      %724 = vmatpush1.msra.mxu0 0.0
      %725 = vmatprep.subr.mxu0 0.0
      %726 = vmatpush1.msra.mxu0 0.0
      %727 = vmatprep.subr.mxu0 0.0
      %728 = vmatpush1.msra.mxu0 0.0
      %729 = vmatprep.subr.mxu0 0.0
      %730 = vmatpush1.msra.mxu0 0.0
      %731 = vmatprep.subr.mxu0 0.0
      %732 = vmatpush1.msra.mxu0 0.0
      %733 = vmatprep.subr.mxu0 0.0
      %734 = vmatpush1.msra.mxu0 0.0
      %735 = vmatprep.subr.mxu0 0.0
      %736 = vmatpush1.msra.mxu0 0.0
      %737 = vmatprep.subr.mxu0 0.0
      %738 = vmatpush1.msra.mxu0 0.0
      %739 = vmatprep.subr.mxu0 0.0
      %740 = vmatpush1.msra.mxu0 0.0
      %741 = vmatprep.subr.mxu0 0.0
      %742 = vmatpush1.msra.mxu0 0.0
      %743 = vmatprep.subr.mxu0 0.0
      %744 = vmatpush1.msra.mxu0 0.0
      %745 = vmatprep.subr.mxu0 0.0
      %746 = vmatpush1.msra.mxu0 0.0
      %747 = vmatprep.subr.mxu0 0.0
      %748 = vmatpush1.msra.mxu0 0.0
      %749 = vmatprep.subr.mxu0 0.0
      %750 = vmatpush1.msra.mxu0 0.0
      %751 = vmatprep.subr.mxu0 0.0
      %752 = vmatpush1.msra.mxu0 0.0
      %753 = vmatprep.subr.mxu0 0.0
      %754 = vmatpush1.msra.mxu0 0.0
      %755 = vmatprep.subr.mxu0 0.0
      %756 = vmatpush1.msra.mxu0 0.0
      %757 = vmatprep.subr.mxu0 0.0
      %758 = vmatpush1.msra.mxu0 0.0
      %759 = vmatprep.subr.mxu0 0.0
      %760 = vmatpush1.msra.mxu0 0.0
      %761 = vmatprep.subr.mxu0 0.0
      %762 = vmatpush1.msra.mxu0 0.0
      %763 = vmatprep.subr.mxu0 0.0
      %764 = vmatpush1.msra.mxu0 0.0
      %765 = vmatprep.subr.mxu0 0.0
      %766 = vmatpush1.msra.mxu0 0.0
      %767 = vmatprep.subr.mxu0 0.0
      %768 = vmatpush1.msra.mxu0 0.0
      %769 = vmatprep.subr.mxu0 0.0
      %770 = vmatpush1.msra.mxu0 0.0
      %771 = vmatprep.subr.mxu0 0.0
      %772 = vmatpush1.msra.mxu0 0.0
      %773 = vmatprep.subr.mxu0 0.0
      %774 = vmatpush1.msra.mxu0 0.0
      %775 = vmatprep.subr.mxu0 0.0
      %776 = vmatpush1.msra.mxu0 0.0
      %777 = vmatprep.mubr.f32.mxu0 0.0
      %778 = vmatmul.mubr.f32.gmra.mrb[0].mxu0 %v708
      %v779 = vpop.f32.mrb[0].mxu0
      %v780 = vadd.f32 %v705, %v779
      %v781 = vpop.f32.mrb[0].mxu0
      %782 = vdwg.mxu0
      %v783 = vmax.f32 %v780, 0.0
      %vm784 = vcmask 130048
      %785 = vst.msk [vmem:[%s221] sm:$0xff] %vm784, %v693
      %786 = vst.msk [vmem:[%s221 + $0x8] sm:$0xff] %vm784, %v694
      %vm787 = vcmask 125952
      %788 = vst.msk [vmem:[%s221 + $0x10] sm:$0xf] %vm787, %v783
      %p789 = scmp.lt.s32.totalorder %s16, 1
      %s790 = scalar_select %p789, %s16, 1
      %s791 = smul.addr %s790, 3
      %s792 = smul.addr %s791, 8
      %s793 = scalar_lea.vmem %s5, %s792
      // Predicated region
      $region41: #{naive_inception_forward.1} parent=39 // pred_check
        %p794 = pneg %p144
      $region42: #{naive_inception_forward.1} parent=39 // pred_check_branch
        %796 = sbr.rel (%p794) target = $region44
      $region43: #{naive_inception_forward.1} parent=39 // pred_region
        _
      $region44: #{naive_inception_forward.1} parent=39 // pred_fallthru
        _
    $region40: #{naive_inception_forward.1} parent=5 // pred_fallthru
      _
    %p797 = scmp.le.s32.totalorder 2, %s11
    // Predicated region
    $region45: #{naive_inception_forward.1} parent=5 // pred_check
      %p798 = pneg %p797
    $region46: #{naive_inception_forward.1} parent=5 // pred_check_branch
      %800 = sbr.rel (%p798) target = $region48
    $region47: #{naive_inception_forward.1} parent=5 // pred_region
      %s801 = ssub.s32 %s11, 2
      // Predicated region
      $region49: #{naive_inception_forward.1} parent=47 // pred_check
        %p802 = pneg %p150
      $region50: #{naive_inception_forward.1} parent=47 // pred_check_branch
        %804 = sbr.rel (%p802) target = $region52
      $region51: #{naive_inception_forward.1} parent=47 // pred_region
        %p805 = scmp.lt.s32.totalorder %s17, 1
        %s806 = scalar_select %p805, %s17, 1
        %s807 = smul.addr %s806, 3
        %s808 = smul.addr %s807, 8
        %s809 = scalar_lea.vmem %s5, %s808
      $region52: #{naive_inception_forward.1} parent=47 // pred_fallthru
        _
    $region48: #{naive_inception_forward.1} parent=5 // pred_fallthru
      _
  $region6: #{naive_inception_forward.1} parent=0 // loop_footer
    %s15 = sadd.s32 1, %s11
  $region7: #{naive_inception_forward.1} parent=0 // loop_footer_branch
    %10 = sbr.rel target = $region3
  $region8: #{naive_inception_forward.1} parent=0 // loop_exit
    _

</llo_original>
